<compile_context>
chip_gen: v6e
topology: v6e:2x2x1
jax: 0.10.0
libtpu: 0.0.40
codegen_flags: <defaults>
</compile_context>

<pallas_src>
import functools

import jax
import jax.numpy as jnp
from jax.experimental import pallas as pl
from jax.experimental.pallas import tpu as pltpu


def _round_up(x, m):
    return ((x + m - 1) // m) * m


# ----------------------------------------------------------------------------
# Kernel: whole MLP fused per batch tile.  All matmuls hit the MXU in bf16 with
# f32 accumulation; bias-add and ReLU run in f32 on the VPU; everything stays
# in VMEM for one tile.  Weights/biases are resident (constant index_map).
# ----------------------------------------------------------------------------
def dnn_kernel(x_ref, w1_ref, b1_ref, w2_ref, b2_ref, w3_ref, b3_ref, o_ref):
    # x arrives unpadded / un-copied (f32); cast to bf16 in-register for the MXU.
    x = x_ref[...].astype(jnp.bfloat16)                                # (TB, D_in)
    h1 = jnp.dot(x, w1_ref[...], preferred_element_type=jnp.float32) + b1_ref[...]
    h1 = jnp.maximum(h1, 0.0)                                          # ReLU (f32)
    h2 = jnp.dot(h1.astype(jnp.bfloat16), w2_ref[...],
                 preferred_element_type=jnp.float32) + b2_ref[...]
    h2 = jnp.maximum(h2, 0.0)                                          # ReLU (f32)
    # Dropout: identity in eval mode.
    # TODO(synk): training-mode dropout would need pltpu.prng_seed/prng_random_bits
    #             masking plus 1/(1-p) scaling.
    out = jnp.dot(h2.astype(jnp.bfloat16), w3_ref[...],
                  preferred_element_type=jnp.float32) + b3_ref[...]
    o_ref[...] = out.astype(o_ref.dtype)                               # bf16 store


# ----------------------------------------------------------------------------
# One-time weight preparation (hoisted out of the per-call forward path):
# pad feature dims to lane-dense multiples of 128 and cast matmul operands to
# bf16.  Zero padding is exact (bias padding 0, ReLU(0)=0).
# ----------------------------------------------------------------------------
def prepare_dnn_params(w1, b1, w2, b2, w3, b3):
    D_in, H = w1.shape
    L = w3.shape[1]
    Hp = _round_up(max(H, 128), 128)
    Lp = _round_up(max(L, 128), 128)
    bf16 = jnp.bfloat16
    w1p = jnp.zeros((D_in, Hp), bf16).at[:, :H].set(w1.astype(bf16))
    w2p = jnp.zeros((Hp, Hp), bf16).at[:H, :H].set(w2.astype(bf16))
    w3p = jnp.zeros((Hp, Lp), bf16).at[:H, :L].set(w3.astype(bf16))
    b1p = jnp.zeros((1, Hp), jnp.float32).at[:, :H].set(b1.astype(jnp.float32))
    b2p = jnp.zeros((1, Hp), jnp.float32).at[:, :H].set(b2.astype(jnp.float32))
    b3p = jnp.zeros((1, Lp), jnp.float32).at[:, :L].set(b3.astype(jnp.float32))
    return (w1p, b1p, w2p, b2p, w3p, b3p)


@functools.partial(jax.jit, static_argnames=("label_dim", "block_b"))
def dnn_forward(x, padded_params, *, label_dim, block_b=None):
    w1p, b1p, w2p, b2p, w3p, b3p = padded_params
    B, D_in = x.shape
    Hp = w1p.shape[1]
    Lp = w3p.shape[1]
    L = label_dim

    # Batch tile selection:
    #   * small B  -> single grid step (block_b = B, legal since it equals the
    #     full dim); avoids per-step overhead and any padded rows.
    #   * large B  -> split into >=2 steps (v7x megacore) with tiles up to 1024
    #     rows; multiple of 16 keeps the bf16 output block sublane-aligned.
    if block_b is None:
        if B < 512:
            block_b = B
        else:
            block_b = min(1024, _round_up(pl.cdiv(B, 2), 16))
    grid = (pl.cdiv(B, block_b),)

    resident_w_bytes = ((w1p.size + w2p.size + w3p.size) * 2
                        + (b1p.size + b2p.size + b3p.size) * 4)

    # Resident weights never change block -> double-buffering buys nothing.
    # Only request single-buffering (and a raised scoped-VMEM limit) once the
    # footprint is big enough to matter (Hp >= 1024); at H=32 this is a no-op.
    big_weights = Hp >= 1024
    wkw = dict(pipeline_mode=pl.Buffered(1)) if big_weights else {}

    compiler_kwargs = dict(dimension_semantics=("parallel",))
    vmem_needed = ((1 if big_weights else 2) * resident_w_bytes
                   + 2 * block_b * (D_in * x.dtype.itemsize + Lp * 2)  # x/out dbl-buf
                   + 2 * block_b * Hp * 4)                             # h1/h2 f32 temps
    if vmem_needed > 32 * 1024 * 1024:
        compiler_kwargs["vmem_limit_bytes"] = min(
            int(vmem_needed * 5 // 4), 100 * 1024 * 1024)

    flops = 2 * B * (D_in * Hp + Hp * Hp + Hp * Lp)
    bytes_accessed = x.size * x.dtype.itemsize + resident_w_bytes + B * Lp * 2

    out = pl.pallas_call(
        dnn_kernel,
        out_shape=jax.ShapeDtypeStruct((B, Lp), jnp.bfloat16),
        grid_spec=pl.GridSpec(
            grid=grid,
            in_specs=[
                pl.BlockSpec((block_b, D_in), lambda i: (i, 0)),        # x tile (unpadded)
                pl.BlockSpec((D_in, Hp), lambda i: (0, 0), **wkw),      # W1 (resident)
                pl.BlockSpec((1, Hp), lambda i: (0, 0), **wkw),         # b1
                pl.BlockSpec((Hp, Hp), lambda i: (0, 0), **wkw),        # W2
                pl.BlockSpec((1, Hp), lambda i: (0, 0), **wkw),         # b2
                pl.BlockSpec((Hp, Lp), lambda i: (0, 0), **wkw),        # W3
                pl.BlockSpec((1, Lp), lambda i: (0, 0), **wkw),         # b3
            ],
            out_specs=pl.BlockSpec((block_b, Lp), lambda i: (i, 0)),    # lane-dense bf16
        ),
        compiler_params=pltpu.CompilerParams(**compiler_kwargs),
        cost_estimate=pl.CostEstimate(
            flops=flops, transcendentals=0, bytes_accessed=bytes_accessed),
    )(x, w1p, b1p, w2p, b2p, w3p, b3p)

    # Tiny slice/cast back to the PyTorch-facing (B, L) f32 result.
    return out[:, :L].astype(jnp.float32)


# ----------------------------------------------------------------------------
# Deterministic parameter init (PyTorch nn.Linear-style uniform bounds).
# ----------------------------------------------------------------------------
def init_linear(key, in_features, out_features):
    kw, kb = jax.random.split(key)
    bound = 1.0 / jnp.sqrt(jnp.float32(in_features))
    # PyTorch stores W as (out, in); we keep it transposed as (in, out) so the
    # kernel computes x @ W, which is mathematically identical to x @ W_pt.T.
    w = jax.random.uniform(kw, (in_features, out_features), jnp.float32, -bound, bound)
    b = jax.random.uniform(kb, (1, out_features), jnp.float32, -bound, bound)
    return w, b


def reference_forward_f32(x, w1, b1, w2, b2, w3, b3):
    h1 = jnp.maximum(x @ w1 + b1, 0.0)
    h2 = jnp.maximum(h1 @ w2 + b2, 0.0)
    return h2 @ w3 + b3


def reference_forward_bf16(x, w1, b1, w2, b2, w3, b3):
    # Same numerics as the kernel: bf16 matmul operands, f32 accumulation,
    # bf16 final store.
    bf = lambda a: a.astype(jnp.bfloat16)
    h1 = jnp.maximum(
        jnp.dot(bf(x), bf(w1), preferred_element_type=jnp.float32) + b1, 0.0)
    h2 = jnp.maximum(
        jnp.dot(bf(h1), bf(w2), preferred_element_type=jnp.float32) + b2, 0.0)
    out = jnp.dot(bf(h2), bf(w3), preferred_element_type=jnp.float32) + b3
    return out.astype(jnp.bfloat16).astype(jnp.float32)


if __name__ == "__main__":
    # params = {'input_dim': 32, 'hidden_size': 32, 'label_dim': 8, 'drop_prob': 0.5}
    B, D_IN, H, L = 8, 32, 32, 8

    key = jax.random.PRNGKey(0)
    kx, k1, k2, k3 = jax.random.split(key, 4)

    x = jax.random.normal(kx, (B, D_IN), jnp.float32)
    w1, b1 = init_linear(k1, D_IN, H)
    w2, b2 = init_linear(k2, H, H)
    w3, b3 = init_linear(k3, H, L)

    padded_params = prepare_dnn_params(w1, b1, w2, b2, w3, b3)

    out = dnn_forward(x, padded_params, label_dim=L)
    out = jax.block_until_ready(out)
    assert out.shape == (B, L)

    ref_bf16 = reference_forward_bf16(x, w1, b1, w2, b2, w3, b3)
    ref_f32 = reference_forward_f32(x, w1, b1, w2, b2, w3, b3)
    assert jnp.allclose(out, ref_bf16, atol=1e-2, rtol=1e-2), "mismatch vs bf16-sim reference"
    assert jnp.allclose(out, ref_f32, atol=5e-2, rtol=5e-2), "mismatch vs f32 reference"

    print("KERNEL_OK")
</pallas_src>

<mosaic_0001>
module attributes {stable_mosaic.version = 11 : i64} {
  func.func @dnn_kernel(%arg0: i32, %arg1: memref<8x32xf32, #tpu.memory_space<vmem>>, %arg2: memref<32x128xbf16, #tpu.memory_space<vmem>>, %arg3: memref<1x128xf32, #tpu.memory_space<vmem>>, %arg4: memref<128x128xbf16, #tpu.memory_space<vmem>>, %arg5: memref<1x128xf32, #tpu.memory_space<vmem>>, %arg6: memref<128x128xbf16, #tpu.memory_space<vmem>>, %arg7: memref<1x128xf32, #tpu.memory_space<vmem>>, %arg8: memref<8x128xbf16, #tpu.memory_space<vmem>>) attributes {dimension_semantics = [#tpu.dimension_semantics<parallel>], iteration_bounds = array<i64: 1>, scalar_prefetch = 0 : i64, scratch_operands = 0 : i64, tpu.core_type = #tpu.core_type<tc>, window_params = [{transform_indices = @transform_0, window_bounds = array<i64: 8, 32>}, {pipeline_mode = #tpu.pipeline_mode<synchronous>, transform_indices = @transform_1, window_bounds = array<i64: 32, 128>}, {pipeline_mode = #tpu.pipeline_mode<synchronous>, transform_indices = @transform_2, window_bounds = array<i64: 1, 128>}, {pipeline_mode = #tpu.pipeline_mode<synchronous>, transform_indices = @transform_3, window_bounds = array<i64: 128, 128>}, {pipeline_mode = #tpu.pipeline_mode<synchronous>, transform_indices = @transform_4, window_bounds = array<i64: 1, 128>}, {pipeline_mode = #tpu.pipeline_mode<synchronous>, transform_indices = @transform_5, window_bounds = array<i64: 128, 128>}, {pipeline_mode = #tpu.pipeline_mode<synchronous>, transform_indices = @transform_6, window_bounds = array<i64: 1, 128>}, {transform_indices = @transform_7, window_bounds = array<i64: 8, 128>}]} {
    %c0 = arith.constant 0 : index
    %c0_0 = arith.constant 0 : index
    %0 = vector.load %arg1[%c0, %c0_0] : memref<8x32xf32, #tpu.memory_space<vmem>>, vector<8x32xf32>
    %1 = arith.truncf %0 : vector<8x32xf32> to vector<8x32xbf16>
    %c0_1 = arith.constant 0 : index
    %c0_2 = arith.constant 0 : index
    %2 = vector.load %arg2[%c0_1, %c0_2] : memref<32x128xbf16, #tpu.memory_space<vmem>>, vector<32x128xbf16>
    %cst = arith.constant dense<0.000000e+00> : vector<8x128xf32>
    %3 = tpu.matmul %1, %2, %cst {dimension_numbers = #tpu.dot_dimension_numbers<[1], [0], [0], [1], [0, 0, 1, 1], [], []>} : vector<8x32xbf16>, vector<32x128xbf16>, vector<8x128xf32> -> vector<8x128xf32>
    %c0_3 = arith.constant 0 : index
    %c0_4 = arith.constant 0 : index
    %4 = vector.load %arg3[%c0_3, %c0_4] : memref<1x128xf32, #tpu.memory_space<vmem>>, vector<1x128xf32>
    %5 = vector.broadcast %4 : vector<1x128xf32> to vector<8x128xf32>
    %6 = arith.addf %3, %5 : vector<8x128xf32>
    %cst_5 = arith.constant 0.000000e+00 : f32
    %7 = vector.broadcast %cst_5 : f32 to vector<8x128xf32>
    %8 = arith.maximumf %6, %7 : vector<8x128xf32>
    %9 = arith.truncf %8 : vector<8x128xf32> to vector<8x128xbf16>
    %c0_6 = arith.constant 0 : index
    %c0_7 = arith.constant 0 : index
    %10 = vector.load %arg4[%c0_6, %c0_7] : memref<128x128xbf16, #tpu.memory_space<vmem>>, vector<128x128xbf16>
    %cst_8 = arith.constant dense<0.000000e+00> : vector<8x128xf32>
    %11 = tpu.matmul %9, %10, %cst_8 {dimension_numbers = #tpu.dot_dimension_numbers<[1], [0], [0], [1], [0, 0, 1, 1], [], []>} : vector<8x128xbf16>, vector<128x128xbf16>, vector<8x128xf32> -> vector<8x128xf32>
    %c0_9 = arith.constant 0 : index
    %c0_10 = arith.constant 0 : index
    %12 = vector.load %arg5[%c0_9, %c0_10] : memref<1x128xf32, #tpu.memory_space<vmem>>, vector<1x128xf32>
    %13 = vector.broadcast %12 : vector<1x128xf32> to vector<8x128xf32>
    %14 = arith.addf %11, %13 : vector<8x128xf32>
    %cst_11 = arith.constant 0.000000e+00 : f32
    %15 = vector.broadcast %cst_11 : f32 to vector<8x128xf32>
    %16 = arith.maximumf %14, %15 : vector<8x128xf32>
    %17 = arith.truncf %16 : vector<8x128xf32> to vector<8x128xbf16>
    %c0_12 = arith.constant 0 : index
    %c0_13 = arith.constant 0 : index
    %18 = vector.load %arg6[%c0_12, %c0_13] : memref<128x128xbf16, #tpu.memory_space<vmem>>, vector<128x128xbf16>
    %cst_14 = arith.constant dense<0.000000e+00> : vector<8x128xf32>
    %19 = tpu.matmul %17, %18, %cst_14 {dimension_numbers = #tpu.dot_dimension_numbers<[1], [0], [0], [1], [0, 0, 1, 1], [], []>} : vector<8x128xbf16>, vector<128x128xbf16>, vector<8x128xf32> -> vector<8x128xf32>
    %c0_15 = arith.constant 0 : index
    %c0_16 = arith.constant 0 : index
    %20 = vector.load %arg7[%c0_15, %c0_16] : memref<1x128xf32, #tpu.memory_space<vmem>>, vector<1x128xf32>
    %21 = vector.broadcast %20 : vector<1x128xf32> to vector<8x128xf32>
    %22 = arith.addf %19, %21 : vector<8x128xf32>
    %23 = arith.truncf %22 : vector<8x128xf32> to vector<8x128xbf16>
    %c0_17 = arith.constant 0 : index
    %c0_18 = arith.constant 0 : index
    %24 = vector.load %arg8[%c0_17, %c0_18] : memref<8x128xbf16, #tpu.memory_space<vmem>>, vector<8x128xbf16>
    tpu.vector_store %arg8[%c0_17, %c0_18], %23 {strides = array<i32>} : memref<8x128xbf16, #tpu.memory_space<vmem>>, vector<8x128xbf16>,
    return
  }
  func.func @transform_0(%arg0: i32) -> (i32, i32) {
    %c0_i32 = arith.constant 0 : i32
    %c0_i32_0 = arith.constant 0 : i32
    return %arg0, %c0_i32 : i32, i32
  }
  func.func @transform_1(%arg0: i32) -> (i32, i32) {
    %c0_i32 = arith.constant 0 : i32
    %c0_i32_0 = arith.constant 0 : i32
    %c0_i32_1 = arith.constant 0 : i32
    return %c0_i32, %c0_i32_0 : i32, i32
  }
  func.func @transform_2(%arg0: i32) -> (i32, i32) {
    %c0_i32 = arith.constant 0 : i32
    %c0_i32_0 = arith.constant 0 : i32
    %c0_i32_1 = arith.constant 0 : i32
    return %c0_i32, %c0_i32_0 : i32, i32
  }
  func.func @transform_3(%arg0: i32) -> (i32, i32) {
    %c0_i32 = arith.constant 0 : i32
    %c0_i32_0 = arith.constant 0 : i32
    %c0_i32_1 = arith.constant 0 : i32
    return %c0_i32, %c0_i32_0 : i32, i32
  }
  func.func @transform_4(%arg0: i32) -> (i32, i32) {
    %c0_i32 = arith.constant 0 : i32
    %c0_i32_0 = arith.constant 0 : i32
    %c0_i32_1 = arith.constant 0 : i32
    return %c0_i32, %c0_i32_0 : i32, i32
  }
  func.func @transform_5(%arg0: i32) -> (i32, i32) {
    %c0_i32 = arith.constant 0 : i32
    %c0_i32_0 = arith.constant 0 : i32
    %c0_i32_1 = arith.constant 0 : i32
    return %c0_i32, %c0_i32_0 : i32, i32
  }
  func.func @transform_6(%arg0: i32) -> (i32, i32) {
    %c0_i32 = arith.constant 0 : i32
    %c0_i32_0 = arith.constant 0 : i32
    %c0_i32_1 = arith.constant 0 : i32
    return %c0_i32, %c0_i32_0 : i32, i32
  }
  func.func @transform_7(%arg0: i32) -> (i32, i32) {
    %c0_i32 = arith.constant 0 : i32
    %c0_i32_0 = arith.constant 0 : i32
    return %arg0, %c0_i32 : i32, i32
  }
}

</mosaic_0001>

<llo_original>
// kernel: dnn_forward.1
$region0: #{dnn_forward.1}
  #allocation0 [shape = 'u32[]', space=smem, size = 0x4, offset = 0x4, fixed_abs, tag = 'smem constant byte address 0x4 - core index']
  #allocation1 [shape = 'u32[144,128]{1,0:T(1,128)}', space=vmem, size = 0x12000, scoped, tag = 'internal scratch']
  %s0 = inlined_call_operand.hbm [shape: f32[8,32], index: 0, kind: input, shape index: {}]
  %s1 = inlined_call_operand.hbm [shape: bf16[32,128], index: 1, kind: input, shape index: {}]
  %s2 = inlined_call_operand.vmem [shape: f32[1,128], index: 2, kind: input, shape index: {}]
  %s3 = inlined_call_operand.hbm [shape: bf16[128,128], index: 3, kind: input, shape index: {}]
  %s4 = inlined_call_operand.vmem [shape: f32[1,128], index: 4, kind: input, shape index: {}]
  %s5 = inlined_call_operand.hbm [shape: bf16[128,128], index: 5, kind: input, shape index: {}]
  %s6 = inlined_call_operand.vmem [shape: f32[1,128], index: 6, kind: input, shape index: {}]
  %s7 = inlined_call_operand.vmem [shape: bf16[8,128], index: 7, kind: output, shape index: {}]
  %s8 = sld [smem:[#allocation0]]
  $region54: #{dnn_forward.1} parent=0
    _
  %s10 = ssub.s32 1, %s8
  %s11 = scalar_select 0, %s10, %s8
  $region1: #{dnn_forward.1} parent=0
    #allocation2 [shape = 'u8[4096]{0}', space=vmem, size = 0x1000, scoped, tag = 'input window, operand 0, single buffered']
    #allocation3 [shape = 's32[1]{0}', space=sflag, size = 0x4, scoped, tag = 'scoped memory for dnn_forward.1']
    #allocation4 [shape = 'u8[8192]{0}', space=vmem, size = 0x2000, scoped, tag = 'input window, operand 1, single buffered']
    #allocation5 [shape = 's32[1]{0}', space=sflag, size = 0x4, scoped, tag = 'scoped memory for dnn_forward.1']
    #allocation6 [shape = 'u8[32768]{0}', space=vmem, size = 0x8000, scoped, tag = 'input window, operand 3, single buffered']
    #allocation7 [shape = 'u8[32768]{0}', space=vmem, size = 0x8000, scoped, tag = 'input window, operand 5, single buffered']
    #allocation8 [shape = 's32[1]{0}', space=sflag, size = 0x4, scoped, tag = 'scoped memory for dnn_forward.1']
    %12 = vsyncpa [#allocation3], 0
    %13 = vsyncpa [#allocation5], 0
    %14 = vsyncpa [#allocation8], 0
    // Predicated region
    $region2: #{dnn_forward.1} parent=1 // pred_check
      _
    $region3: #{dnn_forward.1} parent=1 // pred_check_branch
      %16 = sbr.rel (0) target = $region5
    $region4: #{dnn_forward.1} parent=1 // pred_region
      %s18 = ssub.s32 128, 128
      %19 = vsyncadd [#allocation3], %s18
      %s21 = sshll.u32 [#allocation2], 4
      %s22 = int_to_ptr.vmem [resolvable:$true] %s21
      %24 = dma.hbm_to_vmem [thread:$0]  %s0, 128, %s22, [#allocation3]
    $region5: #{dnn_forward.1} parent=1 // pred_fallthru
      _
    // Predicated region
    $region6: #{dnn_forward.1} parent=1 // pred_check
      _
    $region7: #{dnn_forward.1} parent=1 // pred_check_branch
      %26 = sbr.rel (0) target = $region9
    $region8: #{dnn_forward.1} parent=1 // pred_region
      %s28 = ssub.s32 256, 256
      %29 = vsyncadd [#allocation5], %s28
      %s30 = sshll.u32 [#allocation4], 4
      %s31 = int_to_ptr.vmem [resolvable:$true] %s30
      %36 = dma.hbm_to_vmem [thread:$0]  %s1, 256, %s31, [#allocation5], 64, 64, 4
    $region9: #{dnn_forward.1} parent=1 // pred_fallthru
      _
    // Predicated region
    $region10: #{dnn_forward.1} parent=1 // pred_check
      _
    $region11: #{dnn_forward.1} parent=1 // pred_check_branch
      %38 = sbr.rel (0) target = $region13
    $region12: #{dnn_forward.1} parent=1 // pred_region
      _
    $region13: #{dnn_forward.1} parent=1 // pred_fallthru
      _
    // Predicated region
    $region14: #{dnn_forward.1} parent=1 // pred_check
      _
    $region15: #{dnn_forward.1} parent=1 // pred_check_branch
      %40 = sbr.rel (0) target = $region17
    $region16: #{dnn_forward.1} parent=1 // pred_region
      %s42 = ssub.s32 1024, 1024
      %43 = vsyncadd [#allocation5], %s42
      %s44 = sshll.u32 [#allocation6], 4
      %s45 = int_to_ptr.vmem [resolvable:$true] %s44
      %50 = dma.hbm_to_vmem [thread:$0]  %s3, 1024, %s45, [#allocation5], 64, 64, 4
    $region17: #{dnn_forward.1} parent=1 // pred_fallthru
      _
    // Predicated region
    $region18: #{dnn_forward.1} parent=1 // pred_check
      _
    $region19: #{dnn_forward.1} parent=1 // pred_check_branch
      %52 = sbr.rel (0) target = $region21
    $region20: #{dnn_forward.1} parent=1 // pred_region
      _
    $region21: #{dnn_forward.1} parent=1 // pred_fallthru
      _
    // Predicated region
    $region22: #{dnn_forward.1} parent=1 // pred_check
      _
    $region23: #{dnn_forward.1} parent=1 // pred_check_branch
      %54 = sbr.rel (0) target = $region25
    $region24: #{dnn_forward.1} parent=1 // pred_region
      %s56 = ssub.s32 1024, 1024
      %57 = vsyncadd [#allocation8], %s56
      %s58 = sshll.u32 [#allocation7], 4
      %s59 = int_to_ptr.vmem [resolvable:$true] %s58
      %64 = dma.hbm_to_vmem [thread:$0]  %s5, 1024, %s59, [#allocation8], 64, 64, 4
    $region25: #{dnn_forward.1} parent=1 // pred_fallthru
      _
    // Predicated region
    $region26: #{dnn_forward.1} parent=1 // pred_check
      _
    $region27: #{dnn_forward.1} parent=1 // pred_check_branch
      %66 = sbr.rel (0) target = $region29
    $region28: #{dnn_forward.1} parent=1 // pred_region
      _
    $region29: #{dnn_forward.1} parent=1 // pred_fallthru
      _
    // Predicated region
    $region30: #{dnn_forward.1} parent=1 // pred_check
      _
    $region31: #{dnn_forward.1} parent=1 // pred_check_branch
      %68 = sbr.rel (0) target = $region33
    $region32: #{dnn_forward.1} parent=1 // pred_region
      %69 = dma.done [#allocation3], 128
    $region33: #{dnn_forward.1} parent=1 // pred_fallthru
      _
    // Predicated region
    $region34: #{dnn_forward.1} parent=1 // pred_check
      _
    $region35: #{dnn_forward.1} parent=1 // pred_check_branch
      %71 = sbr.rel (0) target = $region37
    $region36: #{dnn_forward.1} parent=1 // pred_region
      %72 = dma.done [#allocation5], 256
    $region37: #{dnn_forward.1} parent=1 // pred_fallthru
      _
    // Predicated region
    $region38: #{dnn_forward.1} parent=1 // pred_check
      _
    $region39: #{dnn_forward.1} parent=1 // pred_check_branch
      %74 = sbr.rel (0) target = $region41
    $region40: #{dnn_forward.1} parent=1 // pred_region
      %75 = dma.done [#allocation5], 1024
    $region41: #{dnn_forward.1} parent=1 // pred_fallthru
      _
    // Predicated region
    $region42: #{dnn_forward.1} parent=1 // pred_check
      _
    $region43: #{dnn_forward.1} parent=1 // pred_check_branch
      %77 = sbr.rel (0) target = $region45
    $region44: #{dnn_forward.1} parent=1 // pred_region
      %78 = dma.done [#allocation8], 1024
    $region45: #{dnn_forward.1} parent=1 // pred_fallthru
      _
    %v80 = vld [vmem:[#allocation2] sm:$0xff]
    %v81 = vpack.c.bf16 %v80, %v80
    %v82 = vld [vmem:[#allocation4] sm:$0xf]
    %v83 = vld [vmem:[#allocation4 + $0x4] sm:$0xf]
    %v84 = vld [vmem:[#allocation4 + $0x8] sm:$0xf]
    %v85 = vld [vmem:[#allocation4 + $0xc] sm:$0xf]
    %v86 = vld [vmem:[%s2] sm:$0x1]
    %v88 = vlaneseq
    %v89 = vshrl.u32 %v88, 7
    %v90 = vsub.s32 0, %v89
    %v91 = vrot.slane %v86, %v90
    %v97 = vunpack.c.l.b16 %v82
    %v98 = vunpack.c.l.b16 %v83
    %v99 = vunpack.c.l.b16 %v84
    %v100 = vunpack.c.l.b16 %v85
    %v101 = vpack.c.b16 %v98, %v97
    %v102 = vpack.c.b16 %v100, %v99
    %vm105 = vcmask 261120
    %v107 = vsel %vm105, %v81, 0
    %109 = vmatprep.subr.bf16.mxu0 0
    %110 = vmatpush1.bf16.msra.mxu0 0
    %111 = vmatprep.subr.bf16.mxu0 0
    %112 = vmatpush1.bf16.msra.mxu0 0
    %113 = vmatprep.subr.bf16.mxu0 0
    %114 = vmatpush1.bf16.msra.mxu0 0
    %115 = vmatprep.subr.bf16.mxu0 0
    %116 = vmatpush1.bf16.msra.mxu0 0
    %117 = vmatprep.subr.bf16.mxu0 0
    %118 = vmatpush1.bf16.msra.mxu0 0
    %119 = vmatprep.subr.bf16.mxu0 0
    %120 = vmatpush1.bf16.msra.mxu0 0
    %121 = vmatprep.subr.bf16.mxu0 0
    %122 = vmatpush1.bf16.msra.mxu0 %v102
    %123 = vmatprep.subr.bf16.mxu0 0
    %124 = vmatpush1.bf16.msra.mxu0 %v101
    %125 = vmatprep.subr.bf16.mxu0 0
    %126 = vmatpush2.bf16.msra.mxu0 0
    %127 = vmatprep.subr.bf16.mxu0 0
    %128 = vmatpush2.bf16.msra.mxu0 0
    %129 = vmatprep.subr.bf16.mxu0 0
    %130 = vmatpush2.bf16.msra.mxu0 0
    %131 = vmatprep.subr.bf16.mxu0 0
    %132 = vmatpush2.bf16.msra.mxu0 0
    %133 = vmatprep.subr.bf16.mxu0 0
    %134 = vmatpush2.bf16.msra.mxu0 0
    %135 = vmatprep.subr.bf16.mxu0 0
    %136 = vmatpush2.bf16.msra.mxu0 0
    %137 = vmatprep.subr.bf16.mxu0 0
    %138 = vmatpush2.bf16.msra.mxu0 0
    %139 = vmatprep.subr.bf16.mxu0 0
    %140 = vmatpush2.bf16.msra.mxu0 0
    %141 = vmatprep.mubr.bf16.mxu0 0
    %142 = vmatmul.mubr.bf16.gmra.mxu0 %v107
    %v143 = vpop.f32.mrf.mxu0
    %v144 = vadd.f32 %v91, %v143
    %v145 = vpop.f32.mrf.mxu0
    %v146 = vpop.f32.mrf.mxu0
    %v147 = vpop.f32.mrf.mxu0
    %148 = vdwg.mxu0
    %v149 = vmax.f32 %v144, 0.0
    %v150 = vpack.c.bf16 %v149, %v149
    %v151 = vld [vmem:[#allocation6] sm:$0xf]
    %v152 = vld [vmem:[#allocation6 + $0x4] sm:$0xf]
    %v153 = vld [vmem:[#allocation6 + $0x8] sm:$0xf]
    %v154 = vld [vmem:[#allocation6 + $0xc] sm:$0xf]
    %v155 = vld [vmem:[#allocation6 + $0x10] sm:$0xf]
    %v156 = vld [vmem:[#allocation6 + $0x14] sm:$0xf]
    %v157 = vld [vmem:[#allocation6 + $0x18] sm:$0xf]
    %v158 = vld [vmem:[#allocation6 + $0x1c] sm:$0xf]
    %v159 = vld [vmem:[#allocation6 + $0x20] sm:$0xf]
    %v160 = vld [vmem:[#allocation6 + $0x24] sm:$0xf]
    %v161 = vld [vmem:[#allocation6 + $0x28] sm:$0xf]
    %v162 = vld [vmem:[#allocation6 + $0x2c] sm:$0xf]
    %v163 = vld [vmem:[#allocation6 + $0x30] sm:$0xf]
    %v164 = vld [vmem:[#allocation6 + $0x34] sm:$0xf]
    %v165 = vld [vmem:[#allocation6 + $0x38] sm:$0xf]
    %v166 = vld [vmem:[#allocation6 + $0x3c] sm:$0xf]
    %v167 = vld [vmem:[%s4] sm:$0x1]
    %v169 = vlaneseq
    %v170 = vshrl.u32 %v169, 7
    %v171 = vsub.s32 0, %v170
    %v172 = vrot.slane %v167, %v171
    %v190 = vunpack.c.l.b16 %v151
    %v191 = vunpack.c.l.b16 %v152
    %v192 = vunpack.c.l.b16 %v153
    %v193 = vunpack.c.l.b16 %v154
    %v194 = vunpack.c.l.b16 %v155
    %v195 = vunpack.c.l.b16 %v156
    %v196 = vunpack.c.l.b16 %v157
    %v197 = vunpack.c.l.b16 %v158
    %v198 = vunpack.c.l.b16 %v159
    %v199 = vunpack.c.l.b16 %v160
    %v200 = vunpack.c.l.b16 %v161
    %v201 = vunpack.c.l.b16 %v162
    %v202 = vunpack.c.l.b16 %v163
    %v203 = vunpack.c.l.b16 %v164
    %v204 = vunpack.c.l.b16 %v165
    %v205 = vunpack.c.l.b16 %v166
    %v206 = vpack.c.b16 %v191, %v190
    %v207 = vpack.c.b16 %v193, %v192
    %v208 = vpack.c.b16 %v195, %v194
    %v209 = vpack.c.b16 %v197, %v196
    %v210 = vpack.c.b16 %v199, %v198
    %v211 = vpack.c.b16 %v201, %v200
    %v212 = vpack.c.b16 %v203, %v202
    %v213 = vpack.c.b16 %v205, %v204
    %222 = vmatprep.subr.bf16.mxu0 0
    %223 = vmatpush1.bf16.msra.mxu0 %v213
    %224 = vmatprep.subr.bf16.mxu0 0
    %225 = vmatpush1.bf16.msra.mxu0 %v212
    %226 = vmatprep.subr.bf16.mxu0 0
    %227 = vmatpush1.bf16.msra.mxu0 %v211
    %228 = vmatprep.subr.bf16.mxu0 0
    %229 = vmatpush1.bf16.msra.mxu0 %v210
    %230 = vmatprep.subr.bf16.mxu0 0
    %231 = vmatpush1.bf16.msra.mxu0 %v209
    %232 = vmatprep.subr.bf16.mxu0 0
    %233 = vmatpush1.bf16.msra.mxu0 %v208
    %234 = vmatprep.subr.bf16.mxu0 0
    %235 = vmatpush1.bf16.msra.mxu0 %v207
    %236 = vmatprep.subr.bf16.mxu0 0
    %237 = vmatpush1.bf16.msra.mxu0 %v206
    %238 = vmatprep.subr.bf16.mxu0 0
    %239 = vmatpush2.bf16.msra.mxu0 0
    %240 = vmatprep.subr.bf16.mxu0 0
    %241 = vmatpush2.bf16.msra.mxu0 0
    %242 = vmatprep.subr.bf16.mxu0 0
    %243 = vmatpush2.bf16.msra.mxu0 0
    %244 = vmatprep.subr.bf16.mxu0 0
    %245 = vmatpush2.bf16.msra.mxu0 0
    %246 = vmatprep.subr.bf16.mxu0 0
    %247 = vmatpush2.bf16.msra.mxu0 0
    %248 = vmatprep.subr.bf16.mxu0 0
    %249 = vmatpush2.bf16.msra.mxu0 0
    %250 = vmatprep.subr.bf16.mxu0 0
    %251 = vmatpush2.bf16.msra.mxu0 0
    %252 = vmatprep.subr.bf16.mxu0 0
    %253 = vmatpush2.bf16.msra.mxu0 0
    %254 = vmatprep.mubr.bf16.mxu0 0
    %255 = vmatmul.mubr.bf16.gmra.mxu0 %v150
    %v256 = vpop.f32.mrf.mxu0
    %v257 = vadd.f32 %v172, %v256
    %v258 = vpop.f32.mrf.mxu0
    %v259 = vpop.f32.mrf.mxu0
    %v260 = vpop.f32.mrf.mxu0
    %261 = vdwg.mxu0
    %v262 = vmax.f32 %v257, 0.0
    %v263 = vpack.c.bf16 %v262, %v262
    %v264 = vld [vmem:[#allocation7] sm:$0xf]
    %v265 = vld [vmem:[#allocation7 + $0x4] sm:$0xf]
    %v266 = vld [vmem:[#allocation7 + $0x8] sm:$0xf]
    %v267 = vld [vmem:[#allocation7 + $0xc] sm:$0xf]
    %v268 = vld [vmem:[#allocation7 + $0x10] sm:$0xf]
    %v269 = vld [vmem:[#allocation7 + $0x14] sm:$0xf]
    %v270 = vld [vmem:[#allocation7 + $0x18] sm:$0xf]
    %v271 = vld [vmem:[#allocation7 + $0x1c] sm:$0xf]
    %v272 = vld [vmem:[#allocation7 + $0x20] sm:$0xf]
    %v273 = vld [vmem:[#allocation7 + $0x24] sm:$0xf]
    %v274 = vld [vmem:[#allocation7 + $0x28] sm:$0xf]
    %v275 = vld [vmem:[#allocation7 + $0x2c] sm:$0xf]
    %v276 = vld [vmem:[#allocation7 + $0x30] sm:$0xf]
    %v277 = vld [vmem:[#allocation7 + $0x34] sm:$0xf]
    %v278 = vld [vmem:[#allocation7 + $0x38] sm:$0xf]
    %v279 = vld [vmem:[#allocation7 + $0x3c] sm:$0xf]
    %v280 = vld [vmem:[%s6] sm:$0x1]
    %v282 = vlaneseq
    %v283 = vshrl.u32 %v282, 7
    %v284 = vsub.s32 0, %v283
    %v285 = vrot.slane %v280, %v284
    %v303 = vunpack.c.l.b16 %v264
    %v304 = vunpack.c.l.b16 %v265
    %v305 = vunpack.c.l.b16 %v266
    %v306 = vunpack.c.l.b16 %v267
    %v307 = vunpack.c.l.b16 %v268
    %v308 = vunpack.c.l.b16 %v269
    %v309 = vunpack.c.l.b16 %v270
    %v310 = vunpack.c.l.b16 %v271
    %v311 = vunpack.c.l.b16 %v272
    %v312 = vunpack.c.l.b16 %v273
    %v313 = vunpack.c.l.b16 %v274
    %v314 = vunpack.c.l.b16 %v275
    %v315 = vunpack.c.l.b16 %v276
    %v316 = vunpack.c.l.b16 %v277
    %v317 = vunpack.c.l.b16 %v278
    %v318 = vunpack.c.l.b16 %v279
    %v319 = vpack.c.b16 %v304, %v303
    %v320 = vpack.c.b16 %v306, %v305
    %v321 = vpack.c.b16 %v308, %v307
    %v322 = vpack.c.b16 %v310, %v309
    %v323 = vpack.c.b16 %v312, %v311
    %v324 = vpack.c.b16 %v314, %v313
    %v325 = vpack.c.b16 %v316, %v315
    %v326 = vpack.c.b16 %v318, %v317
    %335 = vmatprep.subr.bf16.mxu0 0
    %336 = vmatpush1.bf16.msra.mxu0 %v326
    %337 = vmatprep.subr.bf16.mxu0 0
    %338 = vmatpush1.bf16.msra.mxu0 %v325
    %339 = vmatprep.subr.bf16.mxu0 0
    %340 = vmatpush1.bf16.msra.mxu0 %v324
    %341 = vmatprep.subr.bf16.mxu0 0
    %342 = vmatpush1.bf16.msra.mxu0 %v323
    %343 = vmatprep.subr.bf16.mxu0 0
    %344 = vmatpush1.bf16.msra.mxu0 %v322
    %345 = vmatprep.subr.bf16.mxu0 0
    %346 = vmatpush1.bf16.msra.mxu0 %v321
    %347 = vmatprep.subr.bf16.mxu0 0
    %348 = vmatpush1.bf16.msra.mxu0 %v320
    %349 = vmatprep.subr.bf16.mxu0 0
    %350 = vmatpush1.bf16.msra.mxu0 %v319
    %351 = vmatprep.subr.bf16.mxu0 0
    %352 = vmatpush2.bf16.msra.mxu0 0
    %353 = vmatprep.subr.bf16.mxu0 0
    %354 = vmatpush2.bf16.msra.mxu0 0
    %355 = vmatprep.subr.bf16.mxu0 0
    %356 = vmatpush2.bf16.msra.mxu0 0
    %357 = vmatprep.subr.bf16.mxu0 0
    %358 = vmatpush2.bf16.msra.mxu0 0
    %359 = vmatprep.subr.bf16.mxu0 0
    %360 = vmatpush2.bf16.msra.mxu0 0
    %361 = vmatprep.subr.bf16.mxu0 0
    %362 = vmatpush2.bf16.msra.mxu0 0
    %363 = vmatprep.subr.bf16.mxu0 0
    %364 = vmatpush2.bf16.msra.mxu0 0
    %365 = vmatprep.subr.bf16.mxu0 0
    %366 = vmatpush2.bf16.msra.mxu0 0
    %367 = vmatprep.mubr.bf16.mxu0 0
    %368 = vmatmul.mubr.bf16.gmra.mxu0 %v263
    %v369 = vpop.f32.mrf.mxu0
    %v370 = vadd.f32 %v285, %v369
    %v371 = vpop.f32.mrf.mxu0
    %v372 = vpop.f32.mrf.mxu0
    %v373 = vpop.f32.mrf.mxu0
    %374 = vdwg.mxu0
    %v375 = vpack.c.bf16 %v370, %v370
    %376 = vst [vmem:[%s7] sm:$0xf] %v375
    // Predicated region
    $region46: #{dnn_forward.1} parent=1 // pred_check
      _
    $region47: #{dnn_forward.1} parent=1 // pred_check_branch
      %378 = sbr.rel (0) target = $region49
    $region48: #{dnn_forward.1} parent=1 // pred_region
      _
    $region49: #{dnn_forward.1} parent=1 // pred_fallthru
      _
    // Predicated region
    $region50: #{dnn_forward.1} parent=1 // pred_check
      _
    $region51: #{dnn_forward.1} parent=1 // pred_check_branch
      %380 = sbr.rel (0) target = $region53
    $region52: #{dnn_forward.1} parent=1 // pred_region
      _
    $region53: #{dnn_forward.1} parent=1 // pred_fallthru
      _
    %381 = vsyncpa [#allocation3], 1
    %382 = vsyncpa [#allocation5], 1
    %383 = vsyncpa [#allocation8], 1

</llo_original>
